<compile_context>
chip_gen: v6e
topology: v6e:2x2x1
jax: 0.10.0
libtpu: 0.0.40
codegen_flags: <defaults>
</compile_context>

<pallas_src>
import functools

import jax
import jax.numpy as jnp
from jax.experimental import pallas as pl
from jax.experimental.pallas import tpu as pltpu


def _round_up(x, m):
    return ((x + m - 1) // m) * m


def simple_model_kernel(ids_ref, emb_ref, w_ref, b_ref, out_ref, *, seq_len):
    # ids_ref : (TB, S)          int32
    # emb_ref : (V_pad, H_pad)   bf16   (zero-padded)
    # w_ref   : (H_pad, V_pad)   bf16   (zero-padded)
    # b_ref   : (1, V_pad)       f32    (pad columns = -1e30; keep f32!)
    # out_ref : (TB, V_pad)      f32
    TB = ids_ref.shape[0]
    V_pad = emb_ref.shape[0]

    ids = ids_ref[...]                                                # (TB, S)

    # --- fused embedding gather + mean-pool ---
    # counts[b, v] = #occurrences of v in row b  (raw integers, exact in bf16)
    # pooled      = (counts @ E) / S
    vocab_iota = jax.lax.broadcasted_iota(jnp.int32, (TB, V_pad), 1)  # (TB,V_pad)
    counts = jnp.zeros((TB, V_pad), jnp.bfloat16)
    for s in range(seq_len):  # static unroll; S is tiny
        counts = counts + (ids[:, s:s + 1] == vocab_iota).astype(jnp.bfloat16)

    pooled = jnp.dot(counts, emb_ref[...],
                     preferred_element_type=jnp.float32)              # (TB,H_pad)
    pooled = pooled * jnp.float32(1.0 / seq_len)                      # scale on H, in f32

    # --- Linear(hidden -> vocab) ---
    logits = jnp.dot(pooled.astype(jnp.bfloat16), w_ref[...],
                     preferred_element_type=jnp.float32) + b_ref[...]  # (TB,V_pad)

    # --- Softmax over vocab (torch dim=1); pad lanes carry -1e30 -> prob ~0 ---
    m = jnp.max(logits, axis=-1, keepdims=True)
    e = jnp.exp(logits - m)
    denom = jnp.sum(e, axis=-1, keepdims=True)
    out_ref[...] = e * pl.reciprocal(denom, approx=True)


def prepare_params(emb_table, w, b):
    """One-time weight preparation (hoisted off the hot path).

    emb_table: (V, H) f32; w: (H, V) f32 (transpose of torch Linear.weight);
    b: (V,) f32. Returns lane-dense padded bf16 weights + f32 bias and dims.
    """
    vocab, hidden = emb_table.shape
    V_pad = _round_up(vocab, 128)
    H_pad = _round_up(hidden, 128)

    emb_p = jnp.pad(emb_table.astype(jnp.bfloat16),
                    ((0, V_pad - vocab), (0, H_pad - hidden)))
    w_p = jnp.pad(w.astype(jnp.bfloat16),
                  ((0, H_pad - hidden), (0, V_pad - vocab)))
    # Bias stays f32; -1e30 pad lanes -> ~0 softmax prob. Do NOT cast to bf16.
    b_p = jnp.pad(b.astype(jnp.float32).reshape(1, vocab),
                  ((0, 0), (0, V_pad - vocab)), constant_values=-1e30)

    emb_p, w_p, b_p = jax.block_until_ready((emb_p, w_p, b_p))
    return {"emb_p": emb_p, "w_p": w_p, "b_p": b_p,
            "vocab": vocab, "hidden": hidden, "V_pad": V_pad, "H_pad": H_pad}


def _pick_batch_tile(batch):
    """Sublane-aligned batch tile; >=2 grid steps once batch grows (v7x TCs)."""
    if batch <= 8:
        return 8
    return _round_up(pl.cdiv(batch, 2), 8)


def simple_model_forward(ids, params):
    """ids: (batch, seq) int32. Returns (batch, vocab) f32 softmax probs."""
    batch, seq = ids.shape
    vocab, V_pad, H_pad = params["vocab"], params["V_pad"], params["H_pad"]

    tb = _pick_batch_tile(batch)
    batch_pad = _round_up(batch, tb)
    ids_p = jnp.pad(ids.astype(jnp.int32), ((0, batch_pad - batch), (0, 0)))
    grid = (batch_pad // tb,)

    kernel = functools.partial(simple_model_kernel, seq_len=seq)

    out_pad = pl.pallas_call(
        kernel,
        out_shape=jax.ShapeDtypeStruct((batch_pad, V_pad), jnp.float32),
        grid_spec=pltpu.PrefetchScalarGridSpec(
            num_scalar_prefetch=0,
            grid=grid,
            in_specs=[
                pl.BlockSpec((tb, seq), lambda i: (i, 0)),        # ids
                pl.BlockSpec((V_pad, H_pad), lambda i: (0, 0)),   # emb_table
                pl.BlockSpec((H_pad, V_pad), lambda i: (0, 0)),   # W
                pl.BlockSpec((1, V_pad), lambda i: (0, 0)),       # bias
            ],
            out_specs=pl.BlockSpec((tb, V_pad), lambda i: (i, 0)),
        ),
        compiler_params=pltpu.CompilerParams(
            dimension_semantics=("parallel",),
            vmem_limit_bytes=32 * 1024 * 1024,
        ),
    )(ids_p, params["emb_p"], params["w_p"], params["b_p"])

    return out_pad[:batch, :vocab]


def reference_forward(ids, emb_table, w, b):
    emb = jnp.take(emb_table, ids, axis=0)        # (B, S, H)
    pooled = jnp.mean(emb, axis=1)                # (B, H)
    logits = pooled @ w + b                       # (B, V)
    return jax.nn.softmax(logits, axis=1)


if __name__ == "__main__":
    vocab_size, hidden_size, input_size = 32, 32, 8
    batch = 2

    key = jax.random.PRNGKey(0)
    k_ids, k_emb, k_w, k_b = jax.random.split(key, 4)

    ids = jax.random.randint(k_ids, (batch, input_size), 0, vocab_size,
                             dtype=jnp.int32)
    emb_table = jax.random.normal(k_emb, (vocab_size, hidden_size),
                                  dtype=jnp.float32) * 0.1
    # torch nn.Linear(hidden, vocab).weight has shape (vocab, hidden); we store
    # its transpose (hidden, vocab) so the kernel does pooled @ W directly.
    w = jax.random.normal(k_w, (hidden_size, vocab_size),
                          dtype=jnp.float32) * 0.1
    b = jax.random.normal(k_b, (vocab_size,), dtype=jnp.float32) * 0.1

    # One-time prep (pad + bf16 cast) — kept off the per-call path.
    params = prepare_params(emb_table, w, b)

    out = simple_model_forward(ids, params)
    out = jax.block_until_ready(out)

    ref = reference_forward(ids, emb_table, w, b)
    assert out.shape == (batch, vocab_size)
    # bf16 MXU matmuls + approx reciprocal -> compare with bf16-level tolerance.
    assert jnp.allclose(out, ref, rtol=5e-2, atol=2e-3), "mismatch vs reference"
    assert jnp.allclose(jnp.sum(out, axis=1), 1.0, atol=5e-3)

    print("KERNEL_OK")
</pallas_src>

<mosaic_0001>
module attributes {stable_mosaic.version = 11 : i64} {
  func.func @simple_model_kernel(%arg0: i32, %arg1: memref<8x8xi32, #tpu.memory_space<vmem>>, %arg2: memref<128x128xbf16, #tpu.memory_space<vmem>>, %arg3: memref<128x128xbf16, #tpu.memory_space<vmem>>, %arg4: memref<1x128xf32, #tpu.memory_space<vmem>>, %arg5: memref<8x128xf32, #tpu.memory_space<vmem>>) attributes {dimension_semantics = [#tpu.dimension_semantics<parallel>], iteration_bounds = array<i64: 1>, scalar_prefetch = 0 : i64, scratch_operands = 0 : i64, tpu.core_type = #tpu.core_type<tc>, window_params = [{transform_indices = @transform_0, window_bounds = array<i64: 8, 8>}, {pipeline_mode = #tpu.pipeline_mode<synchronous>, transform_indices = @transform_1, window_bounds = array<i64: 128, 128>}, {pipeline_mode = #tpu.pipeline_mode<synchronous>, transform_indices = @transform_2, window_bounds = array<i64: 128, 128>}, {pipeline_mode = #tpu.pipeline_mode<synchronous>, transform_indices = @transform_3, window_bounds = array<i64: 1, 128>}, {transform_indices = @transform_4, window_bounds = array<i64: 8, 128>}]} {
    %c0 = arith.constant 0 : index
    %c0_0 = arith.constant 0 : index
    %0 = vector.load %arg1[%c0, %c0_0] : memref<8x8xi32, #tpu.memory_space<vmem>>, vector<8x8xi32>
    %1 = tpu.iota {dimensions = array<i32: 1>} : vector<8x128xi32>
    %cst = arith.constant 0.000000e+00 : bf16
    %2 = vector.broadcast %cst : bf16 to vector<8x128xbf16>
    %3 = vector.extract_strided_slice %0 {offsets = [0, 0], sizes = [8, 1], strides = [1, 1]} : vector<8x8xi32> to vector<8x1xi32>
    %4 = vector.broadcast %3 : vector<8x1xi32> to vector<8x128xi32>
    %5 = arith.cmpi eq, %4, %1 : vector<8x128xi32>
    %6 = arith.extui %5 : vector<8x128xi1> to vector<8x128xi32>
    %7 = arith.sitofp %6 : vector<8x128xi32> to vector<8x128xf32>
    %8 = arith.truncf %7 : vector<8x128xf32> to vector<8x128xbf16>
    %9 = arith.addf %2, %8 : vector<8x128xbf16>
    %10 = vector.extract_strided_slice %0 {offsets = [0, 1], sizes = [8, 1], strides = [1, 1]} : vector<8x8xi32> to vector<8x1xi32>
    %11 = vector.broadcast %10 : vector<8x1xi32> to vector<8x128xi32>
    %12 = arith.cmpi eq, %11, %1 : vector<8x128xi32>
    %13 = arith.extui %12 : vector<8x128xi1> to vector<8x128xi32>
    %14 = arith.sitofp %13 : vector<8x128xi32> to vector<8x128xf32>
    %15 = arith.truncf %14 : vector<8x128xf32> to vector<8x128xbf16>
    %16 = arith.addf %9, %15 : vector<8x128xbf16>
    %17 = vector.extract_strided_slice %0 {offsets = [0, 2], sizes = [8, 1], strides = [1, 1]} : vector<8x8xi32> to vector<8x1xi32>
    %18 = vector.broadcast %17 : vector<8x1xi32> to vector<8x128xi32>
    %19 = arith.cmpi eq, %18, %1 : vector<8x128xi32>
    %20 = arith.extui %19 : vector<8x128xi1> to vector<8x128xi32>
    %21 = arith.sitofp %20 : vector<8x128xi32> to vector<8x128xf32>
    %22 = arith.truncf %21 : vector<8x128xf32> to vector<8x128xbf16>
    %23 = arith.addf %16, %22 : vector<8x128xbf16>
    %24 = vector.extract_strided_slice %0 {offsets = [0, 3], sizes = [8, 1], strides = [1, 1]} : vector<8x8xi32> to vector<8x1xi32>
    %25 = vector.broadcast %24 : vector<8x1xi32> to vector<8x128xi32>
    %26 = arith.cmpi eq, %25, %1 : vector<8x128xi32>
    %27 = arith.extui %26 : vector<8x128xi1> to vector<8x128xi32>
    %28 = arith.sitofp %27 : vector<8x128xi32> to vector<8x128xf32>
    %29 = arith.truncf %28 : vector<8x128xf32> to vector<8x128xbf16>
    %30 = arith.addf %23, %29 : vector<8x128xbf16>
    %31 = vector.extract_strided_slice %0 {offsets = [0, 4], sizes = [8, 1], strides = [1, 1]} : vector<8x8xi32> to vector<8x1xi32>
    %32 = vector.broadcast %31 : vector<8x1xi32> to vector<8x128xi32>
    %33 = arith.cmpi eq, %32, %1 : vector<8x128xi32>
    %34 = arith.extui %33 : vector<8x128xi1> to vector<8x128xi32>
    %35 = arith.sitofp %34 : vector<8x128xi32> to vector<8x128xf32>
    %36 = arith.truncf %35 : vector<8x128xf32> to vector<8x128xbf16>
    %37 = arith.addf %30, %36 : vector<8x128xbf16>
    %38 = vector.extract_strided_slice %0 {offsets = [0, 5], sizes = [8, 1], strides = [1, 1]} : vector<8x8xi32> to vector<8x1xi32>
    %39 = vector.broadcast %38 : vector<8x1xi32> to vector<8x128xi32>
    %40 = arith.cmpi eq, %39, %1 : vector<8x128xi32>
    %41 = arith.extui %40 : vector<8x128xi1> to vector<8x128xi32>
    %42 = arith.sitofp %41 : vector<8x128xi32> to vector<8x128xf32>
    %43 = arith.truncf %42 : vector<8x128xf32> to vector<8x128xbf16>
    %44 = arith.addf %37, %43 : vector<8x128xbf16>
    %45 = vector.extract_strided_slice %0 {offsets = [0, 6], sizes = [8, 1], strides = [1, 1]} : vector<8x8xi32> to vector<8x1xi32>
    %46 = vector.broadcast %45 : vector<8x1xi32> to vector<8x128xi32>
    %47 = arith.cmpi eq, %46, %1 : vector<8x128xi32>
    %48 = arith.extui %47 : vector<8x128xi1> to vector<8x128xi32>
    %49 = arith.sitofp %48 : vector<8x128xi32> to vector<8x128xf32>
    %50 = arith.truncf %49 : vector<8x128xf32> to vector<8x128xbf16>
    %51 = arith.addf %44, %50 : vector<8x128xbf16>
    %52 = vector.extract_strided_slice %0 {offsets = [0, 7], sizes = [8, 1], strides = [1, 1]} : vector<8x8xi32> to vector<8x1xi32>
    %53 = vector.broadcast %52 : vector<8x1xi32> to vector<8x128xi32>
    %54 = arith.cmpi eq, %53, %1 : vector<8x128xi32>
    %55 = arith.extui %54 : vector<8x128xi1> to vector<8x128xi32>
    %56 = arith.sitofp %55 : vector<8x128xi32> to vector<8x128xf32>
    %57 = arith.truncf %56 : vector<8x128xf32> to vector<8x128xbf16>
    %58 = arith.addf %51, %57 : vector<8x128xbf16>
    %c0_1 = arith.constant 0 : index
    %c0_2 = arith.constant 0 : index
    %59 = vector.load %arg2[%c0_1, %c0_2] : memref<128x128xbf16, #tpu.memory_space<vmem>>, vector<128x128xbf16>
    %cst_3 = arith.constant dense<0.000000e+00> : vector<8x128xf32>
    %60 = tpu.matmul %58, %59, %cst_3 {dimension_numbers = #tpu.dot_dimension_numbers<[1], [0], [0], [1], [0, 0, 1, 1], [], []>} : vector<8x128xbf16>, vector<128x128xbf16>, vector<8x128xf32> -> vector<8x128xf32>
    %cst_4 = arith.constant 1.250000e-01 : f32
    %61 = vector.broadcast %cst_4 : f32 to vector<8x128xf32>
    %62 = arith.mulf %60, %61 : vector<8x128xf32>
    %63 = arith.truncf %62 : vector<8x128xf32> to vector<8x128xbf16>
    %c0_5 = arith.constant 0 : index
    %c0_6 = arith.constant 0 : index
    %64 = vector.load %arg3[%c0_5, %c0_6] : memref<128x128xbf16, #tpu.memory_space<vmem>>, vector<128x128xbf16>
    %cst_7 = arith.constant dense<0.000000e+00> : vector<8x128xf32>
    %65 = tpu.matmul %63, %64, %cst_7 {dimension_numbers = #tpu.dot_dimension_numbers<[1], [0], [0], [1], [0, 0, 1, 1], [], []>} : vector<8x128xbf16>, vector<128x128xbf16>, vector<8x128xf32> -> vector<8x128xf32>
    %c0_8 = arith.constant 0 : index
    %c0_9 = arith.constant 0 : index
    %66 = vector.load %arg4[%c0_8, %c0_9] : memref<1x128xf32, #tpu.memory_space<vmem>>, vector<1x128xf32>
    %67 = vector.broadcast %66 : vector<1x128xf32> to vector<8x128xf32>
    %68 = arith.addf %65, %67 : vector<8x128xf32>
    %cst_10 = arith.constant dense<0xFF800000> : vector<8xf32>
    %69 = vector.multi_reduction <maximumf>, %68, %cst_10 [1] : vector<8x128xf32> to vector<8xf32>
    %70 = vector.shape_cast %69 : vector<8xf32> to vector<8x1xf32>
    %71 = vector.broadcast %70 : vector<8x1xf32> to vector<8x128xf32>
    %72 = arith.subf %68, %71 : vector<8x128xf32>
    %73 = math.exp %72 : vector<8x128xf32>
    %cst_11 = arith.constant dense<0.000000e+00> : vector<8xf32>
    %74 = vector.multi_reduction <add>, %73, %cst_11 [1] : vector<8x128xf32> to vector<8xf32>
    %75 = vector.shape_cast %74 : vector<8xf32> to vector<8x1xf32>
    %76 = tpu.reciprocal %75 {approx = true} : vector<8x1xf32> -> vector<8x1xf32>
    %77 = vector.broadcast %76 : vector<8x1xf32> to vector<8x128xf32>
    %78 = arith.mulf %73, %77 : vector<8x128xf32>
    %c0_12 = arith.constant 0 : index
    %c0_13 = arith.constant 0 : index
    %79 = vector.load %arg5[%c0_12, %c0_13] : memref<8x128xf32, #tpu.memory_space<vmem>>, vector<8x128xf32>
    tpu.vector_store %arg5[%c0_12, %c0_13], %78 {strides = array<i32>} : memref<8x128xf32, #tpu.memory_space<vmem>>, vector<8x128xf32>,
    return
  }
  func.func @transform_0(%arg0: i32) -> (i32, i32) {
    %c0_i32 = arith.constant 0 : i32
    %c0_i32_0 = arith.constant 0 : i32
    return %arg0, %c0_i32 : i32, i32
  }
  func.func @transform_1(%arg0: i32) -> (i32, i32) {
    %c0_i32 = arith.constant 0 : i32
    %c0_i32_0 = arith.constant 0 : i32
    %c0_i32_1 = arith.constant 0 : i32
    return %c0_i32, %c0_i32_0 : i32, i32
  }
  func.func @transform_2(%arg0: i32) -> (i32, i32) {
    %c0_i32 = arith.constant 0 : i32
    %c0_i32_0 = arith.constant 0 : i32
    %c0_i32_1 = arith.constant 0 : i32
    return %c0_i32, %c0_i32_0 : i32, i32
  }
  func.func @transform_3(%arg0: i32) -> (i32, i32) {
    %c0_i32 = arith.constant 0 : i32
    %c0_i32_0 = arith.constant 0 : i32
    %c0_i32_1 = arith.constant 0 : i32
    return %c0_i32, %c0_i32_0 : i32, i32
  }
  func.func @transform_4(%arg0: i32) -> (i32, i32) {
    %c0_i32 = arith.constant 0 : i32
    %c0_i32_0 = arith.constant 0 : i32
    return %arg0, %c0_i32 : i32, i32
  }
}

</mosaic_0001>

<llo_original>
// kernel: tpu_custom_call.1
$region0: #{tpu_custom_call.1}
  #allocation0 [shape = 'u32[]', space=smem, size = 0x4, offset = 0x4, fixed_abs, tag = 'smem constant byte address 0x4 - core index']
  #allocation1 [shape = 'u32[144,128]{1,0:T(1,128)}', space=vmem, size = 0x12000, scoped, tag = 'internal scratch']
  %s0 = inlined_call_operand.hbm [shape: s32[8,8], index: 0, kind: input, shape index: {}]
  %s1 = inlined_call_operand.hbm [shape: bf16[128,128], index: 1, kind: input, shape index: {}]
  %s2 = inlined_call_operand.hbm [shape: bf16[128,128], index: 2, kind: input, shape index: {}]
  %s3 = inlined_call_operand.vmem [shape: f32[1,128], index: 3, kind: input, shape index: {}]
  %s4 = inlined_call_operand.hbm [shape: f32[8,128], index: 4, kind: output, shape index: {}]
  %s5 = sld [smem:[#allocation0]]
  $region38: #{tpu_custom_call.1} parent=0
    _
  %s7 = ssub.s32 1, %s5
  %s8 = scalar_select 0, %s7, %s5
  $region1: #{tpu_custom_call.1} parent=0
    #allocation2 [shape = 'u8[4096]{0}', space=vmem, size = 0x1000, scoped, tag = 'input window, operand 0, single buffered']
    #allocation3 [shape = 's32[1]{0}', space=sflag, size = 0x4, scoped, tag = 'scoped memory for tpu_custom_call.1']
    #allocation4 [shape = 's32[1]{0}', space=sflag, size = 0x4, scoped, tag = 'scoped memory for tpu_custom_call.1']
    #allocation5 [shape = 'u8[32768]{0}', space=vmem, size = 0x8000, scoped, tag = 'input window, operand 1, single buffered']
    #allocation6 [shape = 's32[1]{0}', space=sflag, size = 0x4, scoped, tag = 'scoped memory for tpu_custom_call.1']
    #allocation7 [shape = 'u8[32768]{0}', space=vmem, size = 0x8000, scoped, tag = 'input window, operand 2, single buffered']
    #allocation8 [shape = 'u8[4096]{0}', space=vmem, size = 0x1000, scoped, tag = 'output window, operand 0, single buffered']
    %9 = vsyncpa [#allocation3], 0
    %10 = vsyncpa [#allocation6], 0
    %11 = vsyncpa [#allocation4], 0
    // Predicated region
    $region2: #{tpu_custom_call.1} parent=1 // pred_check
      _
    $region3: #{tpu_custom_call.1} parent=1 // pred_check_branch
      %13 = sbr.rel (0) target = $region5
    $region4: #{tpu_custom_call.1} parent=1 // pred_region
      %s15 = ssub.s32 128, 128
      %16 = vsyncadd [#allocation3], %s15
      %s18 = sshll.u32 [#allocation2], 4
      %s19 = int_to_ptr.vmem [resolvable:$true] %s18
      %21 = dma.hbm_to_vmem [thread:$0]  %s0, 128, %s19, [#allocation3]
    $region5: #{tpu_custom_call.1} parent=1 // pred_fallthru
      _
    // Predicated region
    $region6: #{tpu_custom_call.1} parent=1 // pred_check
      _
    $region7: #{tpu_custom_call.1} parent=1 // pred_check_branch
      %23 = sbr.rel (0) target = $region9
    $region8: #{tpu_custom_call.1} parent=1 // pred_region
      %s25 = ssub.s32 1024, 1024
      %26 = vsyncadd [#allocation6], %s25
      %s27 = sshll.u32 [#allocation5], 4
      %s28 = int_to_ptr.vmem [resolvable:$true] %s27
      %33 = dma.hbm_to_vmem [thread:$0]  %s1, 1024, %s28, [#allocation6], 64, 64, 4
    $region9: #{tpu_custom_call.1} parent=1 // pred_fallthru
      _
    // Predicated region
    $region10: #{tpu_custom_call.1} parent=1 // pred_check
      _
    $region11: #{tpu_custom_call.1} parent=1 // pred_check_branch
      %35 = sbr.rel (0) target = $region13
    $region12: #{tpu_custom_call.1} parent=1 // pred_region
      %s37 = ssub.s32 1024, 1024
      %38 = vsyncadd [#allocation6], %s37
      %s39 = sshll.u32 [#allocation7], 4
      %s40 = int_to_ptr.vmem [resolvable:$true] %s39
      %45 = dma.hbm_to_vmem [thread:$0]  %s2, 1024, %s40, [#allocation6], 64, 64, 4
    $region13: #{tpu_custom_call.1} parent=1 // pred_fallthru
      _
    // Predicated region
    $region14: #{tpu_custom_call.1} parent=1 // pred_check
      _
    $region15: #{tpu_custom_call.1} parent=1 // pred_check_branch
      %47 = sbr.rel (0) target = $region17
    $region16: #{tpu_custom_call.1} parent=1 // pred_region
      _
    $region17: #{tpu_custom_call.1} parent=1 // pred_fallthru
      _
    // Predicated region
    $region18: #{tpu_custom_call.1} parent=1 // pred_check
      _
    $region19: #{tpu_custom_call.1} parent=1 // pred_check_branch
      %49 = sbr.rel (0) target = $region21
    $region20: #{tpu_custom_call.1} parent=1 // pred_region
      %50 = dma.done [#allocation3], 128
    $region21: #{tpu_custom_call.1} parent=1 // pred_fallthru
      _
    // Predicated region
    $region22: #{tpu_custom_call.1} parent=1 // pred_check
      _
    $region23: #{tpu_custom_call.1} parent=1 // pred_check_branch
      %52 = sbr.rel (0) target = $region25
    $region24: #{tpu_custom_call.1} parent=1 // pred_region
      %53 = dma.done [#allocation6], 1024
    $region25: #{tpu_custom_call.1} parent=1 // pred_fallthru
      _
    // Predicated region
    $region26: #{tpu_custom_call.1} parent=1 // pred_check
      _
    $region27: #{tpu_custom_call.1} parent=1 // pred_check_branch
      %55 = sbr.rel (0) target = $region29
    $region28: #{tpu_custom_call.1} parent=1 // pred_region
      %56 = dma.done [#allocation6], 1024
    $region29: #{tpu_custom_call.1} parent=1 // pred_fallthru
      _
    %v58 = vld [vmem:[#allocation2] sm:$0xff]
    %v59 = vlaneseq
    %v60 = vand.u32 %v59, 127
    %61 = vset.pattern.permute.xlu0 0
    %62 = vperm.xlu0 %61, %v58
    %v63 = vpop.permute.xlu0 %62
    %vm64 = vcmp.eq.s32.totalorder %v63, %v60
    %v65 = vsel %vm64, 1, 0
    %v66 = vcvt.s32.f32 %v65
    %v67 = vpack.c.bf16 %v66, %v66
    %v68 = vadd.bf16 %v67, 0
    %69 = vset.pattern.permute.xlu0 1
    %70 = vperm.xlu0 %69, %v58
    %v71 = vpop.permute.xlu0 %70
    %vm72 = vcmp.eq.s32.totalorder %v71, %v60
    %v73 = vsel %vm72, 1, 0
    %v74 = vcvt.s32.f32 %v73
    %v75 = vpack.c.bf16 %v74, %v74
    %v76 = vadd.bf16 %v68, %v75
    %77 = vset.pattern.permute.xlu0 2
    %78 = vperm.xlu0 %77, %v58
    %v79 = vpop.permute.xlu0 %78
    %vm80 = vcmp.eq.s32.totalorder %v79, %v60
    %v81 = vsel %vm80, 1, 0
    %v82 = vcvt.s32.f32 %v81
    %v83 = vpack.c.bf16 %v82, %v82
    %v84 = vadd.bf16 %v76, %v83
    %85 = vset.pattern.permute.xlu0 3
    %86 = vperm.xlu0 %85, %v58
    %v87 = vpop.permute.xlu0 %86
    %vm88 = vcmp.eq.s32.totalorder %v87, %v60
    %v89 = vsel %vm88, 1, 0
    %v90 = vcvt.s32.f32 %v89
    %v91 = vpack.c.bf16 %v90, %v90
    %v92 = vadd.bf16 %v84, %v91
    %93 = vset.pattern.permute.xlu0 4
    %94 = vperm.xlu0 %93, %v58
    %v95 = vpop.permute.xlu0 %94
    %vm96 = vcmp.eq.s32.totalorder %v95, %v60
    %v97 = vsel %vm96, 1, 0
    %v98 = vcvt.s32.f32 %v97
    %v99 = vpack.c.bf16 %v98, %v98
    %v100 = vadd.bf16 %v92, %v99
    %101 = vset.pattern.permute.xlu0 5
    %102 = vperm.xlu0 %101, %v58
    %v103 = vpop.permute.xlu0 %102
    %vm104 = vcmp.eq.s32.totalorder %v103, %v60
    %v105 = vsel %vm104, 1, 0
    %v106 = vcvt.s32.f32 %v105
    %v107 = vpack.c.bf16 %v106, %v106
    %v108 = vadd.bf16 %v100, %v107
    %109 = vset.pattern.permute.xlu0 6
    %110 = vperm.xlu0 %109, %v58
    %v111 = vpop.permute.xlu0 %110
    %vm112 = vcmp.eq.s32.totalorder %v111, %v60
    %v113 = vsel %vm112, 1, 0
    %v114 = vcvt.s32.f32 %v113
    %v115 = vpack.c.bf16 %v114, %v114
    %v116 = vadd.bf16 %v108, %v115
    %117 = vset.pattern.permute.xlu0 7
    %118 = vperm.xlu0 %117, %v58
    %v119 = vpop.permute.xlu0 %118
    %vm120 = vcmp.eq.s32.totalorder %v119, %v60
    %v121 = vsel %vm120, 1, 0
    %v122 = vcvt.s32.f32 %v121
    %v123 = vpack.c.bf16 %v122, %v122
    %v124 = vadd.bf16 %v116, %v123
    %v125 = vld [vmem:[#allocation5] sm:$0xf]
    %v126 = vld [vmem:[#allocation5 + $0x4] sm:$0xf]
    %v127 = vld [vmem:[#allocation5 + $0x8] sm:$0xf]
    %v128 = vld [vmem:[#allocation5 + $0xc] sm:$0xf]
    %v129 = vld [vmem:[#allocation5 + $0x10] sm:$0xf]
    %v130 = vld [vmem:[#allocation5 + $0x14] sm:$0xf]
    %v131 = vld [vmem:[#allocation5 + $0x18] sm:$0xf]
    %v132 = vld [vmem:[#allocation5 + $0x1c] sm:$0xf]
    %v133 = vld [vmem:[#allocation5 + $0x20] sm:$0xf]
    %v134 = vld [vmem:[#allocation5 + $0x24] sm:$0xf]
    %v135 = vld [vmem:[#allocation5 + $0x28] sm:$0xf]
    %v136 = vld [vmem:[#allocation5 + $0x2c] sm:$0xf]
    %v137 = vld [vmem:[#allocation5 + $0x30] sm:$0xf]
    %v138 = vld [vmem:[#allocation5 + $0x34] sm:$0xf]
    %v139 = vld [vmem:[#allocation5 + $0x38] sm:$0xf]
    %v140 = vld [vmem:[#allocation5 + $0x3c] sm:$0xf]
    %v157 = vunpack.c.l.b16 %v125
    %v158 = vunpack.c.l.b16 %v126
    %v159 = vunpack.c.l.b16 %v127
    %v160 = vunpack.c.l.b16 %v128
    %v161 = vunpack.c.l.b16 %v129
    %v162 = vunpack.c.l.b16 %v130
    %v163 = vunpack.c.l.b16 %v131
    %v164 = vunpack.c.l.b16 %v132
    %v165 = vunpack.c.l.b16 %v133
    %v166 = vunpack.c.l.b16 %v134
    %v167 = vunpack.c.l.b16 %v135
    %v168 = vunpack.c.l.b16 %v136
    %v169 = vunpack.c.l.b16 %v137
    %v170 = vunpack.c.l.b16 %v138
    %v171 = vunpack.c.l.b16 %v139
    %v172 = vunpack.c.l.b16 %v140
    %v173 = vpack.c.b16 %v158, %v157
    %v174 = vpack.c.b16 %v160, %v159
    %v175 = vpack.c.b16 %v162, %v161
    %v176 = vpack.c.b16 %v164, %v163
    %v177 = vpack.c.b16 %v166, %v165
    %v178 = vpack.c.b16 %v168, %v167
    %v179 = vpack.c.b16 %v170, %v169
    %v180 = vpack.c.b16 %v172, %v171
    %189 = vmatprep.subr.bf16.mxu0 0
    %190 = vmatpush1.bf16.msra.mxu0 %v180
    %191 = vmatprep.subr.bf16.mxu0 0
    %192 = vmatpush1.bf16.msra.mxu0 %v179
    %193 = vmatprep.subr.bf16.mxu0 0
    %194 = vmatpush1.bf16.msra.mxu0 %v178
    %195 = vmatprep.subr.bf16.mxu0 0
    %196 = vmatpush1.bf16.msra.mxu0 %v177
    %197 = vmatprep.subr.bf16.mxu0 0
    %198 = vmatpush1.bf16.msra.mxu0 %v176
    %199 = vmatprep.subr.bf16.mxu0 0
    %200 = vmatpush1.bf16.msra.mxu0 %v175
    %201 = vmatprep.subr.bf16.mxu0 0
    %202 = vmatpush1.bf16.msra.mxu0 %v174
    %203 = vmatprep.subr.bf16.mxu0 0
    %204 = vmatpush1.bf16.msra.mxu0 %v173
    %205 = vmatprep.subr.bf16.mxu0 0
    %206 = vmatpush2.bf16.msra.mxu0 0
    %207 = vmatprep.subr.bf16.mxu0 0
    %208 = vmatpush2.bf16.msra.mxu0 0
    %209 = vmatprep.subr.bf16.mxu0 0
    %210 = vmatpush2.bf16.msra.mxu0 0
    %211 = vmatprep.subr.bf16.mxu0 0
    %212 = vmatpush2.bf16.msra.mxu0 0
    %213 = vmatprep.subr.bf16.mxu0 0
    %214 = vmatpush2.bf16.msra.mxu0 0
    %215 = vmatprep.subr.bf16.mxu0 0
    %216 = vmatpush2.bf16.msra.mxu0 0
    %217 = vmatprep.subr.bf16.mxu0 0
    %218 = vmatpush2.bf16.msra.mxu0 0
    %219 = vmatprep.subr.bf16.mxu0 0
    %220 = vmatpush2.bf16.msra.mxu0 0
    %221 = vmatprep.mubr.bf16.mxu0 0
    %222 = vmatmul.mubr.bf16.gmra.mxu0 %v124
    %v223 = vpop.f32.mrf.mxu0
    %v224 = vadd.f32 0.0, %v223
    %v225 = vpop.f32.mrf.mxu0
    %v226 = vpop.f32.mrf.mxu0
    %v227 = vpop.f32.mrf.mxu0
    %228 = vdwg.mxu0
    %v229 = vmul.f32 %v224, 0.125
    %v230 = vpack.c.bf16 %v229, %v229
    %v231 = vld [vmem:[#allocation7] sm:$0xf]
    %v232 = vld [vmem:[#allocation7 + $0x4] sm:$0xf]
    %v233 = vld [vmem:[#allocation7 + $0x8] sm:$0xf]
    %v234 = vld [vmem:[#allocation7 + $0xc] sm:$0xf]
    %v235 = vld [vmem:[#allocation7 + $0x10] sm:$0xf]
    %v236 = vld [vmem:[#allocation7 + $0x14] sm:$0xf]
    %v237 = vld [vmem:[#allocation7 + $0x18] sm:$0xf]
    %v238 = vld [vmem:[#allocation7 + $0x1c] sm:$0xf]
    %v239 = vld [vmem:[#allocation7 + $0x20] sm:$0xf]
    %v240 = vld [vmem:[#allocation7 + $0x24] sm:$0xf]
    %v241 = vld [vmem:[#allocation7 + $0x28] sm:$0xf]
    %v242 = vld [vmem:[#allocation7 + $0x2c] sm:$0xf]
    %v243 = vld [vmem:[#allocation7 + $0x30] sm:$0xf]
    %v244 = vld [vmem:[#allocation7 + $0x34] sm:$0xf]
    %v245 = vld [vmem:[#allocation7 + $0x38] sm:$0xf]
    %v246 = vld [vmem:[#allocation7 + $0x3c] sm:$0xf]
    %v247 = vld [vmem:[%s3] sm:$0x1]
    %v249 = vlaneseq
    %v250 = vshrl.u32 %v249, 7
    %v251 = vsub.s32 0, %v250
    %v252 = vrot.slane %v247, %v251
    %v270 = vunpack.c.l.b16 %v231
    %v271 = vunpack.c.l.b16 %v232
    %v272 = vunpack.c.l.b16 %v233
    %v273 = vunpack.c.l.b16 %v234
    %v274 = vunpack.c.l.b16 %v235
    %v275 = vunpack.c.l.b16 %v236
    %v276 = vunpack.c.l.b16 %v237
    %v277 = vunpack.c.l.b16 %v238
    %v278 = vunpack.c.l.b16 %v239
    %v279 = vunpack.c.l.b16 %v240
    %v280 = vunpack.c.l.b16 %v241
    %v281 = vunpack.c.l.b16 %v242
    %v282 = vunpack.c.l.b16 %v243
    %v283 = vunpack.c.l.b16 %v244
    %v284 = vunpack.c.l.b16 %v245
    %v285 = vunpack.c.l.b16 %v246
    %v286 = vpack.c.b16 %v271, %v270
    %v287 = vpack.c.b16 %v273, %v272
    %v288 = vpack.c.b16 %v275, %v274
    %v289 = vpack.c.b16 %v277, %v276
    %v290 = vpack.c.b16 %v279, %v278
    %v291 = vpack.c.b16 %v281, %v280
    %v292 = vpack.c.b16 %v283, %v282
    %v293 = vpack.c.b16 %v285, %v284
    %302 = vmatprep.subr.bf16.mxu0 0
    %303 = vmatpush1.bf16.msra.mxu0 %v293
    %304 = vmatprep.subr.bf16.mxu0 0
    %305 = vmatpush1.bf16.msra.mxu0 %v292
    %306 = vmatprep.subr.bf16.mxu0 0
    %307 = vmatpush1.bf16.msra.mxu0 %v291
    %308 = vmatprep.subr.bf16.mxu0 0
    %309 = vmatpush1.bf16.msra.mxu0 %v290
    %310 = vmatprep.subr.bf16.mxu0 0
    %311 = vmatpush1.bf16.msra.mxu0 %v289
    %312 = vmatprep.subr.bf16.mxu0 0
    %313 = vmatpush1.bf16.msra.mxu0 %v288
    %314 = vmatprep.subr.bf16.mxu0 0
    %315 = vmatpush1.bf16.msra.mxu0 %v287
    %316 = vmatprep.subr.bf16.mxu0 0
    %317 = vmatpush1.bf16.msra.mxu0 %v286
    %318 = vmatprep.subr.bf16.mxu0 0
    %319 = vmatpush2.bf16.msra.mxu0 0
    %320 = vmatprep.subr.bf16.mxu0 0
    %321 = vmatpush2.bf16.msra.mxu0 0
    %322 = vmatprep.subr.bf16.mxu0 0
    %323 = vmatpush2.bf16.msra.mxu0 0
    %324 = vmatprep.subr.bf16.mxu0 0
    %325 = vmatpush2.bf16.msra.mxu0 0
    %326 = vmatprep.subr.bf16.mxu0 0
    %327 = vmatpush2.bf16.msra.mxu0 0
    %328 = vmatprep.subr.bf16.mxu0 0
    %329 = vmatpush2.bf16.msra.mxu0 0
    %330 = vmatprep.subr.bf16.mxu0 0
    %331 = vmatpush2.bf16.msra.mxu0 0
    %332 = vmatprep.subr.bf16.mxu0 0
    %333 = vmatpush2.bf16.msra.mxu0 0
    %334 = vmatprep.mubr.bf16.mxu0 0
    %335 = vmatmul.mubr.bf16.gmra.mxu0 %v230
    %v336 = vpop.f32.mrf.mxu0
    %v337 = vadd.f32 %v252, %v336
    %v338 = vpop.f32.mrf.mxu0
    %v339 = vpop.f32.mrf.mxu0
    %v340 = vpop.f32.mrf.mxu0
    %341 = vdwg.mxu0
    %342 = vmax.xlane.f32.xlu0 %v337
    %v343 = vpop.xlane.xlu0 %342
    %v344 = vsub.f32 %v337, %v343
    %v345 = vmul.f32 %v344, 1.442695
    %v346 = vpow.pop %v345
    %347 = vadd.xlane.f32.xlu0 %v346
    %v348 = vpop.xlane.xlu0 %347
    %v349 = vrcp.pop %v348
    %v350 = vmul.f32 %v346, %v349
    %351 = vst [vmem:[#allocation8] sm:$0xff] %v350
    // Predicated region
    $region30: #{tpu_custom_call.1} parent=1 // pred_check
      _
    $region31: #{tpu_custom_call.1} parent=1 // pred_check_branch
      %353 = sbr.rel (0) target = $region33
    $region32: #{tpu_custom_call.1} parent=1 // pred_region
      %s355 = ssub.s32 128, 128
      %356 = vsyncadd [#allocation4], %s355
      %s358 = sshll.u32 [#allocation8], 4
      %s359 = int_to_ptr.vmem [resolvable:$true] %s358
      %361 = dma.vmem_to_hbm [thread:$0]  %s359, 128, %s4, [#allocation4]
    $region33: #{tpu_custom_call.1} parent=1 // pred_fallthru
      _
    // Predicated region
    $region34: #{tpu_custom_call.1} parent=1 // pred_check
      _
    $region35: #{tpu_custom_call.1} parent=1 // pred_check_branch
      %363 = sbr.rel (0) target = $region37
    $region36: #{tpu_custom_call.1} parent=1 // pred_region
      %364 = dma.done [#allocation4], 128
    $region37: #{tpu_custom_call.1} parent=1 // pred_fallthru
      _
    %365 = vsyncpa [#allocation3], 1
    %366 = vsyncpa [#allocation6], 1
    %367 = vsyncpa [#allocation4], 1

</llo_original>
